<compile_context>
chip_gen: v5e
topology: v5e:2x2
jax: 0.10.0
libtpu: 0.0.40
codegen_flags: <defaults>
</compile_context>

<pallas_src>
import jax
import jax.numpy as jnp
from jax.experimental import pallas as pl
from jax.experimental.pallas import tpu as pltpu


# --------------------------------------------------------------------------
# Kernel: one grid step = one attention-GRU time step for one batch tile.
# Grid = (num_batch_tiles, T); T is innermost so the recurrence is sequential
# per batch tile while batch tiles are independent ("parallel" -> megacore).
# --------------------------------------------------------------------------
def attn_gru_kernel(fact_ref, gate_ref, h0_ref, w_ref, u_ref, b_ref,
                    h_out_ref, h_state):
    # fact:  (tile_b, I)      current fact slice (time step t)
    # gate:  (tile_b, 1)      attention gate g_t
    # h0:    (tile_b, Hp)     initial hidden, lane-padded (read once per tile)
    # w:     (I,  Hp)         W^T, zero-padded output columns (resident)
    # u:     (Hp, Hp)         U^T, zero-padded rows+columns   (resident)
    # b:     (1,  Hp)         bw + bu, zero-padded columns    (resident)
    # h_out: (tile_b, Hp)     final hidden (written at last t only)
    # h_state: VMEM f32 scratch carrying the hidden state across t
    t = pl.program_id(1)

    @pl.when(t == 0)
    def _init():
        h_state[...] = h0_ref[...].astype(jnp.float32)

    hidden = h_state[...]                                  # (tile_b, Hp) f32
    gate = gate_ref[...].astype(jnp.float32)               # (tile_b, 1)

    # Note: z = sigmoid(Wr(fact) + Ur(hidden)) of the PyTorch module is dead
    # code (never used) and intentionally not computed.
    pre = (jnp.dot(fact_ref[...], w_ref[...],
                   preferred_element_type=jnp.float32)
           + jnp.dot(hidden.astype(u_ref.dtype), u_ref[...],
                     preferred_element_type=jnp.float32)
           + b_ref[...].astype(jnp.float32))
    h_hat = jnp.tanh(pre)

    # h = gate*h_hat + (1-gate)*hidden, rewritten to save one multiply.
    h_new = hidden + gate * (h_hat - hidden)
    h_state[...] = h_new

    @pl.when(t == pl.num_programs(1) - 1)
    def _finalize():
        h_out_ref[...] = h_new.astype(h_out_ref.dtype)


# --------------------------------------------------------------------------
# Parameter / layout plumbing
# --------------------------------------------------------------------------
def _round_up(x, m):
    return (x + m - 1) // m * m


def fuse_params(params, input_size, hidden_size, dtype=None):
    """Pad the live weights to the lane-dense (…, Hp) layout.

    Zero padding guarantees padded h_hat columns are tanh(0)=0 and padded
    hidden columns stay 0 through the whole recurrence, so the padded region
    of the output is exactly 0 and unpadding is lossless."""
    h_pad = _round_up(hidden_size, 128)
    pad = h_pad - hidden_size
    w = jnp.pad(params["W_T"], ((0, 0), (0, pad)))                  # (I, Hp)
    u = jnp.pad(params["U_T"], ((0, pad), (0, pad)))                # (Hp, Hp)
    b = jnp.pad(params["bw"] + params["bu"], ((0, 0), (0, pad)))    # (1, Hp)
    if dtype is not None:
        w, u, b = w.astype(dtype), u.astype(dtype), b.astype(dtype)
    return {"w": w, "u": u, "b": b}


def pad_hidden(hidden):
    """(B, H) -> lane-dense (B, Hp) layout used across the episode loop."""
    B, H = hidden.shape
    return jnp.pad(hidden, ((0, 0), (0, _round_up(H, 128) - H)))


def unpad_hidden(hidden_p, hidden_size):
    """Layout boundary only; padded lanes are exactly zero."""
    return hidden_p[:, :hidden_size]


# --------------------------------------------------------------------------
# Tile sizing
# --------------------------------------------------------------------------
_VMEM_BUDGET = 24 * 1024 * 1024   # leave headroom under the 32 MiB scoped limit
_VMEM_LIMIT = 32 * 1024 * 1024    # >= default on all gens; raises v5e's 16 MiB


def _max_tile_b(I, Hp, act_bytes, budget=_VMEM_BUDGET, cap=512):
    # Resident weights counted double-buffered (conservative; see Buffered(1)
    # TODO at top of file).
    fixed = 2 * (I * Hp + Hp * Hp + Hp) * act_bytes
    # Per batch row: fact+gate (x2 double-buffer), h0 + out (x2), f32 scratch.
    per_row = 2 * (I + 1) * act_bytes + 4 * Hp * act_bytes + Hp * 4
    avail = budget - fixed
    if avail <= per_row * 8:
        return 8
    return int(max(8, min(cap, (avail // per_row) // 8 * 8)))


def _choose_tile_b(B, max_tile_b):
    """Largest multiple-of-8 divisor of B that fits; prefer >=2 batch tiles
    (v7x megacore) when B permits; fall back to the whole batch otherwise."""
    candidates = [tb for tb in range(8, min(B, max_tile_b) + 1, 8)
                  if B % tb == 0]
    if not candidates:
        return B
    split = [tb for tb in candidates if tb <= B // 2]
    return max(split) if split else max(candidates)


# --------------------------------------------------------------------------
# Wrappers
# --------------------------------------------------------------------------
def attention_gru(facts, hidden0_p, gates, fused, *, max_tile_b=None):
    """Run the attention-GRU recurrence over T facts in one pallas_call.

    facts:     (T, B, I)  time-major facts
    hidden0_p: (B, Hp)    initial hidden in the lane-padded layout
    gates:     (T, B)     attention gates
    fused:     dict from fuse_params
    returns    (B, Hp)    final hidden, lane-padded layout
    """
    T, B, I = facts.shape
    Bh, Hp = hidden0_p.shape
    assert Bh == B and Hp % 128 == 0, "hidden must be in the padded (B, Hp) layout"
    if not (facts.dtype == hidden0_p.dtype == fused["w"].dtype
            == fused["u"].dtype == fused["b"].dtype):
        raise ValueError("facts, hidden and fused weights must share a dtype")

    act_bytes = jnp.dtype(facts.dtype).itemsize
    if max_tile_b is None:
        max_tile_b = _max_tile_b(I, Hp, act_bytes)
    tile_b = _choose_tile_b(B, max_tile_b)
    num_b = B // tile_b if B % tile_b == 0 else 1  # tile_b==B in the fallback

    gates3 = gates.reshape(T, B, 1).astype(facts.dtype)   # the torch .unsqueeze(1)

    out = pl.pallas_call(
        attn_gru_kernel,
        out_shape=jax.ShapeDtypeStruct((B, Hp), facts.dtype),
        grid_spec=pltpu.PrefetchScalarGridSpec(
            num_scalar_prefetch=0,
            grid=(num_b, T),
            in_specs=[
                pl.BlockSpec((None, tile_b, I), lambda i, t: (t, i, 0)),   # fact_t
                pl.BlockSpec((None, tile_b, 1), lambda i, t: (t, i, 0)),   # gate_t
                pl.BlockSpec((tile_b, Hp), lambda i, t: (i, 0)),           # h0 (per tile)
                pl.BlockSpec((I, Hp), lambda i, t: (0, 0)),                # W (resident)
                pl.BlockSpec((Hp, Hp), lambda i, t: (0, 0)),               # U (resident)
                pl.BlockSpec((1, Hp), lambda i, t: (0, 0)),                # bias (resident)
            ],
            out_specs=pl.BlockSpec((tile_b, Hp), lambda i, t: (i, 0)),
            scratch_shapes=[pltpu.VMEM((tile_b, Hp), jnp.float32)],
        ),
        compiler_params=pltpu.CompilerParams(
            dimension_semantics=("parallel", "arbitrary"),
            vmem_limit_bytes=_VMEM_LIMIT,
        ),
    )(facts, gates3, hidden0_p, fused["w"], fused["u"], fused["b"])
    return out


def attention_gru_cell(fact, hidden_p, gate, fused, **kw):
    """Single AttentionGRUCell step (the PyTorch forward).

    fact: (B, I), hidden_p: (B, Hp) padded layout, gate: (B,).
    Returns the new hidden in the same padded (B, Hp) layout."""
    return attention_gru(fact[None], hidden_p, gate[None], fused, **kw)


# --------------------------------------------------------------------------
# Init + pure-JAX reference (mirrors the PyTorch forward, unfused params)
# --------------------------------------------------------------------------
def init_params(key, input_size, hidden_size, dtype=jnp.float32):
    """Deterministic synthetic init matching the module's *live* params.
    Weights ~ xavier_normal; biases ~ U(-1/sqrt(fan_in), +...) (nn.Linear
    default). Stored transposed: (in_features, out_features).
    Wr / Ur exist in the PyTorch module but feed only the unused 'z' (dead
    code in forward), so they are intentionally not created here."""
    ks = jax.random.split(key, 4)

    def xavier(k, fan_in, fan_out):
        std = (2.0 / (fan_in + fan_out)) ** 0.5
        return (std * jax.random.normal(k, (fan_in, fan_out))).astype(dtype)

    def bias(k, fan_in, fan_out):
        bound = 1.0 / (fan_in ** 0.5)
        return jax.random.uniform(
            k, (1, fan_out), minval=-bound, maxval=bound).astype(dtype)

    return {
        "W_T": xavier(ks[0], input_size, hidden_size),
        "bw":  bias(ks[1], input_size, hidden_size),
        "U_T": xavier(ks[2], hidden_size, hidden_size),
        "bu":  bias(ks[3], hidden_size, hidden_size),
    }


def reference_cell(fact, hidden, gate, p):
    # z = sigmoid(Wr(fact) + Ur(hidden)) is dead code in the PyTorch forward.
    h_hat = jnp.tanh(fact @ p["W_T"] + p["bw"] + hidden @ p["U_T"] + p["bu"])
    g = gate[:, None]
    return g * h_hat + (1.0 - g) * hidden


def reference_episode(facts, hidden0, gates, p):
    h = hidden0
    for t in range(facts.shape[0]):
        h = reference_cell(facts[t], h, gates[t], p)
    return h


# --------------------------------------------------------------------------
if __name__ == "__main__":
    B, T, INPUT_SIZE, HIDDEN_SIZE = 8, 4, 32, 32

    key = jax.random.PRNGKey(0)
    k_f, k_h, k_g, k_p = jax.random.split(key, 4)

    facts = jax.random.normal(k_f, (T, B, INPUT_SIZE), dtype=jnp.float32)
    hidden0 = jax.random.normal(k_h, (B, HIDDEN_SIZE), dtype=jnp.float32)
    gates = jax.random.uniform(k_g, (T, B), dtype=jnp.float32)

    params = init_params(k_p, INPUT_SIZE, HIDDEN_SIZE)

    # ---------- f32: single cell step (exactly the PyTorch forward) ----------
    fused32 = fuse_params(params, INPUT_SIZE, HIDDEN_SIZE)
    h0_p = pad_hidden(hidden0)                              # persistent layout
    h1_p = attention_gru_cell(facts[0], h0_p, gates[0], fused32)
    jax.block_until_ready(h1_p)

    h1_ref = reference_cell(facts[0], hidden0, gates[0], params)
    h1 = unpad_hidden(h1_p, HIDDEN_SIZE)
    assert h1.shape == (B, HIDDEN_SIZE)
    assert jnp.allclose(h1, h1_ref, atol=1e-5, rtol=1e-5), "cell mismatch"
    assert jnp.all(h1_p[:, HIDDEN_SIZE:] == 0), "padded lanes must stay zero"

    # ---------- f32: fused T-step episode in one pallas_call ----------
    hT_p = attention_gru(facts, h0_p, gates, fused32)
    jax.block_until_ready(hT_p)
    hT_ref = reference_episode(facts, hidden0, gates, params)
    assert jnp.allclose(unpad_hidden(hT_p, HIDDEN_SIZE), hT_ref,
                        atol=1e-5, rtol=1e-5), "episode mismatch"

    # ---------- bf16 storage (f32 accumulation inside the kernel) ----------
    fused16 = fuse_params(params, INPUT_SIZE, HIDDEN_SIZE, dtype=jnp.bfloat16)
    facts16 = facts.astype(jnp.bfloat16)
    h0_p16 = h0_p.astype(jnp.bfloat16)
    hT_p16 = attention_gru(facts16, h0_p16, gates, fused16)
    jax.block_until_ready(hT_p16)

    params_bf = {k: v.astype(jnp.bfloat16).astype(jnp.float32)
                 for k, v in params.items()}
    hT_ref16 = reference_episode(
        facts16.astype(jnp.float32),
        h0_p16[:, :HIDDEN_SIZE].astype(jnp.float32),
        gates.astype(jnp.bfloat16).astype(jnp.float32),
        params_bf)
    assert jnp.allclose(
        unpad_hidden(hT_p16, HIDDEN_SIZE).astype(jnp.float32),
        hT_ref16, atol=5e-2, rtol=5e-2), "bf16 episode mismatch"

    print("KERNEL_OK")
</pallas_src>

<mosaic_0001>
module attributes {stable_mosaic.version = 11 : i64} {
  func.func @attn_gru_kernel(%arg0: i32, %arg1: i32, %arg2: memref<1x8x32xf32, #tpu.memory_space<vmem>>, %arg3: memref<1x8x1xf32, #tpu.memory_space<vmem>>, %arg4: memref<8x128xf32, #tpu.memory_space<vmem>>, %arg5: memref<32x128xf32, #tpu.memory_space<vmem>>, %arg6: memref<128x128xf32, #tpu.memory_space<vmem>>, %arg7: memref<1x128xf32, #tpu.memory_space<vmem>>, %arg8: memref<8x128xf32, #tpu.memory_space<vmem>>, %arg9: memref<8x128xf32, #tpu.memory_space<vmem>>) attributes {dimension_semantics = [#tpu.dimension_semantics<parallel>, #tpu.dimension_semantics<arbitrary>], iteration_bounds = array<i64: 1, 1>, scalar_prefetch = 0 : i64, scratch_operands = 1 : i64, tpu.core_type = #tpu.core_type<tc>, window_params = [{transform_indices = @transform_0, window_bounds = array<i64: 1, 8, 32>}, {transform_indices = @transform_1, window_bounds = array<i64: 1, 8, 1>}, {transform_indices = @transform_2, window_bounds = array<i64: 8, 128>}, {pipeline_mode = #tpu.pipeline_mode<synchronous>, transform_indices = @transform_3, window_bounds = array<i64: 32, 128>}, {pipeline_mode = #tpu.pipeline_mode<synchronous>, transform_indices = @transform_4, window_bounds = array<i64: 128, 128>}, {pipeline_mode = #tpu.pipeline_mode<synchronous>, transform_indices = @transform_5, window_bounds = array<i64: 1, 128>}, {transform_indices = @transform_6, window_bounds = array<i64: 8, 128>}]} {
    %c0_i32 = arith.constant 0 : i32
    %0 = arith.cmpi eq, %arg1, %c0_i32 : i32
    %1 = arith.extui %0 : i1 to i32
    %c0_i32_0 = arith.constant 0 : i32
    %2 = arith.cmpi ne, %1, %c0_i32_0 : i32
    scf.if %2 {
      %c0_19 = arith.constant 0 : index
      %c0_20 = arith.constant 0 : index
      %25 = vector.load %arg4[%c0_19, %c0_20] : memref<8x128xf32, #tpu.memory_space<vmem>>, vector<8x128xf32>
      %c0_21 = arith.constant 0 : index
      %c0_22 = arith.constant 0 : index
      %26 = vector.load %arg9[%c0_21, %c0_22] : memref<8x128xf32, #tpu.memory_space<vmem>>, vector<8x128xf32>
      tpu.vector_store %arg9[%c0_21, %c0_22], %25 {strides = array<i32>} : memref<8x128xf32, #tpu.memory_space<vmem>>, vector<8x128xf32>,
    } else {
    }
    %c0 = arith.constant 0 : index
    %c0_1 = arith.constant 0 : index
    %3 = vector.load %arg9[%c0, %c0_1] : memref<8x128xf32, #tpu.memory_space<vmem>>, vector<8x128xf32>
    %c0_2 = arith.constant 0 : index
    %c0_3 = arith.constant 0 : index
    %c0_4 = arith.constant 0 : index
    %4 = vector.load %arg3[%c0_2, %c0_3, %c0_4] : memref<1x8x1xf32, #tpu.memory_space<vmem>>, vector<1x8x1xf32>
    %5 = vector.shape_cast %4 : vector<1x8x1xf32> to vector<8x1xf32>
    %c0_5 = arith.constant 0 : index
    %c0_6 = arith.constant 0 : index
    %c0_7 = arith.constant 0 : index
    %6 = vector.load %arg2[%c0_5, %c0_6, %c0_7] : memref<1x8x32xf32, #tpu.memory_space<vmem>>, vector<1x8x32xf32>
    %7 = vector.shape_cast %6 : vector<1x8x32xf32> to vector<8x32xf32>
    %c0_8 = arith.constant 0 : index
    %c0_9 = arith.constant 0 : index
    %8 = vector.load %arg5[%c0_8, %c0_9] : memref<32x128xf32, #tpu.memory_space<vmem>>, vector<32x128xf32>
    %cst = arith.constant dense<0.000000e+00> : vector<8x128xf32>
    %9 = tpu.matmul %7, %8, %cst {dimension_numbers = #tpu.dot_dimension_numbers<[1], [0], [0], [1], [0, 0, 1, 1], [], []>} : vector<8x32xf32>, vector<32x128xf32>, vector<8x128xf32> -> vector<8x128xf32>
    %c0_10 = arith.constant 0 : index
    %c0_11 = arith.constant 0 : index
    %10 = vector.load %arg6[%c0_10, %c0_11] : memref<128x128xf32, #tpu.memory_space<vmem>>, vector<128x128xf32>
    %cst_12 = arith.constant dense<0.000000e+00> : vector<8x128xf32>
    %11 = tpu.matmul %3, %10, %cst_12 {dimension_numbers = #tpu.dot_dimension_numbers<[1], [0], [0], [1], [0, 0, 1, 1], [], []>} : vector<8x128xf32>, vector<128x128xf32>, vector<8x128xf32> -> vector<8x128xf32>
    %12 = arith.addf %9, %11 : vector<8x128xf32>
    %c0_13 = arith.constant 0 : index
    %c0_14 = arith.constant 0 : index
    %13 = vector.load %arg7[%c0_13, %c0_14] : memref<1x128xf32, #tpu.memory_space<vmem>>, vector<1x128xf32>
    %14 = vector.broadcast %13 : vector<1x128xf32> to vector<8x128xf32>
    %15 = arith.addf %12, %14 : vector<8x128xf32>
    %16 = math.tanh %15 : vector<8x128xf32>
    %17 = arith.subf %16, %3 : vector<8x128xf32>
    %18 = vector.broadcast %5 : vector<8x1xf32> to vector<8x128xf32>
    %19 = arith.mulf %18, %17 : vector<8x128xf32>
    %20 = arith.addf %3, %19 : vector<8x128xf32>
    %c0_15 = arith.constant 0 : index
    %c0_16 = arith.constant 0 : index
    %21 = vector.load %arg9[%c0_15, %c0_16] : memref<8x128xf32, #tpu.memory_space<vmem>>, vector<8x128xf32>
    tpu.vector_store %arg9[%c0_15, %c0_16], %20 {strides = array<i32>} : memref<8x128xf32, #tpu.memory_space<vmem>>, vector<8x128xf32>,
    %c0_i32_17 = arith.constant 0 : i32
    %22 = arith.cmpi eq, %arg1, %c0_i32_17 : i32
    %23 = arith.extui %22 : i1 to i32
    %c0_i32_18 = arith.constant 0 : i32
    %24 = arith.cmpi ne, %23, %c0_i32_18 : i32
    scf.if %24 {
      %c0_19 = arith.constant 0 : index
      %c0_20 = arith.constant 0 : index
      %25 = vector.load %arg8[%c0_19, %c0_20] : memref<8x128xf32, #tpu.memory_space<vmem>>, vector<8x128xf32>
      tpu.vector_store %arg8[%c0_19, %c0_20], %20 {strides = array<i32>} : memref<8x128xf32, #tpu.memory_space<vmem>>, vector<8x128xf32>,
    } else {
    }
    return
  }
  func.func @transform_0(%arg0: i32, %arg1: i32) -> (i32, i32, i32) {
    %c0_i32 = arith.constant 0 : i32
    %c0_i32_0 = arith.constant 0 : i32
    return %arg1, %arg0, %c0_i32 : i32, i32, i32
  }
  func.func @transform_1(%arg0: i32, %arg1: i32) -> (i32, i32, i32) {
    %c0_i32 = arith.constant 0 : i32
    %c0_i32_0 = arith.constant 0 : i32
    return %arg1, %arg0, %c0_i32 : i32, i32, i32
  }
  func.func @transform_2(%arg0: i32, %arg1: i32) -> (i32, i32) {
    %c0_i32 = arith.constant 0 : i32
    %c0_i32_0 = arith.constant 0 : i32
    return %arg0, %c0_i32 : i32, i32
  }
  func.func @transform_3(%arg0: i32, %arg1: i32) -> (i32, i32) {
    %c0_i32 = arith.constant 0 : i32
    %c0_i32_0 = arith.constant 0 : i32
    %c0_i32_1 = arith.constant 0 : i32
    return %c0_i32, %c0_i32_0 : i32, i32
  }
  func.func @transform_4(%arg0: i32, %arg1: i32) -> (i32, i32) {
    %c0_i32 = arith.constant 0 : i32
    %c0_i32_0 = arith.constant 0 : i32
    %c0_i32_1 = arith.constant 0 : i32
    return %c0_i32, %c0_i32_0 : i32, i32
  }
  func.func @transform_5(%arg0: i32, %arg1: i32) -> (i32, i32) {
    %c0_i32 = arith.constant 0 : i32
    %c0_i32_0 = arith.constant 0 : i32
    %c0_i32_1 = arith.constant 0 : i32
    return %c0_i32, %c0_i32_0 : i32, i32
  }
  func.func @transform_6(%arg0: i32, %arg1: i32) -> (i32, i32) {
    %c0_i32 = arith.constant 0 : i32
    %c0_i32_0 = arith.constant 0 : i32
    return %arg0, %c0_i32 : i32, i32
  }
}

</mosaic_0001>

<llo_original>
// kernel: tpu_custom_call.1
$region0: #{tpu_custom_call.1}
  #allocation0 [shape = 'u32[]', space=smem, size = 0x4, offset = 0x4, fixed_abs, tag = 'smem constant byte address 0x4 - core index']
  #allocation1 [shape = 'u32[72,128]{1,0:T(1,128)}', space=vmem, size = 0x9000, scoped, tag = 'internal scratch']
  #allocation2 [shape = 'f32[8,128]{1,0:T(8,128)}', space=vmem, size = 0x1000, scoped, tag = 'scratch operand']
  %s0 = inlined_call_operand.vmem [shape: f32[1,8,32], index: 0, kind: input, shape index: {}]
  %s1 = inlined_call_operand.vmem [shape: f32[1,8,1], index: 1, kind: input, shape index: {}]
  %s2 = inlined_call_operand.hbm [shape: f32[8,128], index: 2, kind: input, shape index: {}]
  %s3 = inlined_call_operand.hbm [shape: f32[32,128], index: 3, kind: input, shape index: {}]
  %s4 = inlined_call_operand.hbm [shape: f32[128,128], index: 4, kind: input, shape index: {}]
  %s5 = inlined_call_operand.vmem [shape: f32[1,128], index: 5, kind: input, shape index: {}]
  %s6 = inlined_call_operand.hbm [shape: f32[8,128], index: 6, kind: output, shape index: {}]
  %s7 = sld [smem:[#allocation0]]
  $region54: #{tpu_custom_call.1} parent=0
    _
  %s9 = ssub.s32 1, %s7
  %s10 = scalar_select 0, %s9, %s7
  $region1: #{tpu_custom_call.1} parent=0
    #allocation3 [shape = 'u8[4096]{0}', space=vmem, size = 0x1000, scoped, tag = 'input window, operand 2, single buffered']
    #allocation4 [shape = 's32[1]{0}', space=sflag, size = 0x4, scoped, tag = 'scoped memory for tpu_custom_call.1']
    #allocation5 [shape = 's32[1]{0}', space=sflag, size = 0x4, scoped, tag = 'scoped memory for tpu_custom_call.1']
    #allocation6 [shape = 'u8[16384]{0}', space=vmem, size = 0x4000, scoped, tag = 'input window, operand 3, single buffered']
    #allocation7 [shape = 's32[1]{0}', space=sflag, size = 0x4, scoped, tag = 'scoped memory for tpu_custom_call.1']
    #allocation8 [shape = 'u8[65536]{0}', space=vmem, size = 0x10000, scoped, tag = 'input window, operand 4, single buffered']
    #allocation9 [shape = 'u8[4096]{0}', space=vmem, size = 0x1000, scoped, tag = 'output window, operand 0, single buffered']
    %11 = vsyncpa [#allocation4], 0
    %12 = vsyncpa [#allocation7], 0
    %13 = vsyncpa [#allocation5], 0
    // Predicated region
    $region2: #{tpu_custom_call.1} parent=1 // pred_check
      _
    $region3: #{tpu_custom_call.1} parent=1 // pred_check_branch
      %15 = sbr.rel (0) target = $region5
    $region4: #{tpu_custom_call.1} parent=1 // pred_region
      _
    $region5: #{tpu_custom_call.1} parent=1 // pred_fallthru
      _
    // Predicated region
    $region6: #{tpu_custom_call.1} parent=1 // pred_check
      _
    $region7: #{tpu_custom_call.1} parent=1 // pred_check_branch
      %17 = sbr.rel (0) target = $region9
    $region8: #{tpu_custom_call.1} parent=1 // pred_region
      _
    $region9: #{tpu_custom_call.1} parent=1 // pred_fallthru
      _
    // Predicated region
    $region10: #{tpu_custom_call.1} parent=1 // pred_check
      _
    $region11: #{tpu_custom_call.1} parent=1 // pred_check_branch
      %19 = sbr.rel (0) target = $region13
    $region12: #{tpu_custom_call.1} parent=1 // pred_region
      %21 = vsyncadd [#allocation4], 0
      %s23 = sshll.u32 %s2, 4
      %s24 = int_to_ptr.hbm [resolvable:$true] %s23
      %s25 = sshll.u32 [#allocation3], 4
      %s26 = int_to_ptr.vmem [resolvable:$true] %s25
      %28 = dma.hbm_to_vmem [thread:$0]  %s24, 128, %s26, [#allocation4]
    $region13: #{tpu_custom_call.1} parent=1 // pred_fallthru
      _
    // Predicated region
    $region14: #{tpu_custom_call.1} parent=1 // pred_check
      _
    $region15: #{tpu_custom_call.1} parent=1 // pred_check_branch
      %30 = sbr.rel (0) target = $region17
    $region16: #{tpu_custom_call.1} parent=1 // pred_region
      %32 = vsyncadd [#allocation7], 0
      %s33 = sshll.u32 %s3, 4
      %s34 = int_to_ptr.hbm [resolvable:$true] %s33
      %s35 = sshll.u32 [#allocation6], 4
      %s36 = int_to_ptr.vmem [resolvable:$true] %s35
      %41 = dma.hbm_to_vmem [thread:$0]  %s34, 512, %s36, [#allocation7], 128, 128, 8
    $region17: #{tpu_custom_call.1} parent=1 // pred_fallthru
      _
    // Predicated region
    $region18: #{tpu_custom_call.1} parent=1 // pred_check
      _
    $region19: #{tpu_custom_call.1} parent=1 // pred_check_branch
      %43 = sbr.rel (0) target = $region21
    $region20: #{tpu_custom_call.1} parent=1 // pred_region
      %45 = vsyncadd [#allocation7], 0
      %s46 = sshll.u32 %s4, 4
      %s47 = int_to_ptr.hbm [resolvable:$true] %s46
      %s48 = sshll.u32 [#allocation8], 4
      %s49 = int_to_ptr.vmem [resolvable:$true] %s48
      %54 = dma.hbm_to_vmem [thread:$0]  %s47, 2048, %s49, [#allocation7], 128, 128, 8
    $region21: #{tpu_custom_call.1} parent=1 // pred_fallthru
      _
    // Predicated region
    $region22: #{tpu_custom_call.1} parent=1 // pred_check
      _
    $region23: #{tpu_custom_call.1} parent=1 // pred_check_branch
      %56 = sbr.rel (0) target = $region25
    $region24: #{tpu_custom_call.1} parent=1 // pred_region
      _
    $region25: #{tpu_custom_call.1} parent=1 // pred_fallthru
      _
    // Predicated region
    $region26: #{tpu_custom_call.1} parent=1 // pred_check
      _
    $region27: #{tpu_custom_call.1} parent=1 // pred_check_branch
      %58 = sbr.rel (0) target = $region29
    $region28: #{tpu_custom_call.1} parent=1 // pred_region
      %60 = dma.done [#allocation4], 128
    $region29: #{tpu_custom_call.1} parent=1 // pred_fallthru
      _
    // Predicated region
    $region30: #{tpu_custom_call.1} parent=1 // pred_check
      _
    $region31: #{tpu_custom_call.1} parent=1 // pred_check_branch
      %62 = sbr.rel (0) target = $region33
    $region32: #{tpu_custom_call.1} parent=1 // pred_region
      %64 = dma.done [#allocation7], 512
    $region33: #{tpu_custom_call.1} parent=1 // pred_fallthru
      _
    // Predicated region
    $region34: #{tpu_custom_call.1} parent=1 // pred_check
      _
    $region35: #{tpu_custom_call.1} parent=1 // pred_check_branch
      %66 = sbr.rel (0) target = $region37
    $region36: #{tpu_custom_call.1} parent=1 // pred_region
      %68 = dma.done [#allocation7], 2048
    $region37: #{tpu_custom_call.1} parent=1 // pred_fallthru
      _
    %p69 = scmp.eq.s32.totalorder 0, 0
    // Predicated region
    $region38: #{tpu_custom_call.1} parent=1 // pred_check
      %p70 = pneg %p69
    $region39: #{tpu_custom_call.1} parent=1 // pred_check_branch
      %72 = sbr.rel (%p70) target = $region41
    $region40: #{tpu_custom_call.1} parent=1 // pred_region
      %v73 = vld [vmem:[#allocation3] sm:$0xff]
      %74 = vst [vmem:[#allocation2] sm:$0xff] %v73
    $region41: #{tpu_custom_call.1} parent=1 // pred_fallthru
      _
    %v75 = vld [vmem:[#allocation2] sm:$0xff]
    %v76 = vld [vmem:[%s1] sm:$0xff]
    %v77 = vld [vmem:[%s0] sm:$0xff]
    %v78 = vld [vmem:[#allocation6] sm:$0xff]
    %v79 = vld [vmem:[#allocation6 + $0x8] sm:$0xff]
    %v80 = vld [vmem:[#allocation6 + $0x10] sm:$0xff]
    %v81 = vld [vmem:[#allocation6 + $0x18] sm:$0xff]
    %v82 = vld [vmem:[#allocation8] sm:$0xff]
    %v83 = vld [vmem:[#allocation8 + $0x8] sm:$0xff]
    %v84 = vld [vmem:[#allocation8 + $0x10] sm:$0xff]
    %v85 = vld [vmem:[#allocation8 + $0x18] sm:$0xff]
    %v86 = vld [vmem:[#allocation8 + $0x20] sm:$0xff]
    %v87 = vld [vmem:[#allocation8 + $0x28] sm:$0xff]
    %v88 = vld [vmem:[#allocation8 + $0x30] sm:$0xff]
    %v89 = vld [vmem:[#allocation8 + $0x38] sm:$0xff]
    %v90 = vld [vmem:[#allocation8 + $0x40] sm:$0xff]
    %v91 = vld [vmem:[#allocation8 + $0x48] sm:$0xff]
    %v92 = vld [vmem:[#allocation8 + $0x50] sm:$0xff]
    %v93 = vld [vmem:[#allocation8 + $0x58] sm:$0xff]
    %v94 = vld [vmem:[#allocation8 + $0x60] sm:$0xff]
    %v95 = vld [vmem:[#allocation8 + $0x68] sm:$0xff]
    %v96 = vld [vmem:[#allocation8 + $0x70] sm:$0xff]
    %v97 = vld [vmem:[#allocation8 + $0x78] sm:$0xff]
    %98 = vmatpush.msra.mxu0 %v97
    %99 = vmatpush.msra.mxu0 %v96
    %100 = vmatpush.msra.mxu0 %v95
    %101 = vmatpush.msra.mxu0 %v94
    %102 = vmatpush.msra.mxu0 %v93
    %103 = vmatpush.msra.mxu0 %v92
    %104 = vmatpush.msra.mxu0 %v91
    %105 = vmatpush.msra.mxu0 %v90
    %106 = vmatpush.msra.mxu0 %v89
    %107 = vmatpush.msra.mxu0 %v88
    %108 = vmatpush.msra.mxu0 %v87
    %109 = vmatpush.msra.mxu0 %v86
    %110 = vmatpush.msra.mxu0 %v85
    %111 = vmatpush.msra.mxu0 %v84
    %112 = vmatpush.msra.mxu0 %v83
    %113 = vmatpush.msra.mxu0 %v82
    %114 = vmatmul.f32.gmra.mxu0 %v75
    %v115 = vpop.f32.mrf.mxu0
    %v116 = vadd.f32 0.0, %v115
    %117 = vdwg.mxu0
    %vm118 = vcmask 261120
    %v120 = vsel %vm118, %v77, 0
    %122 = vmatpush.msra.mxu0 0.0
    %123 = vmatpush.msra.mxu0 0.0
    %124 = vmatpush.msra.mxu0 0.0
    %125 = vmatpush.msra.mxu0 0.0
    %126 = vmatpush.msra.mxu0 0.0
    %127 = vmatpush.msra.mxu0 0.0
    %128 = vmatpush.msra.mxu0 0.0
    %129 = vmatpush.msra.mxu0 0.0
    %130 = vmatpush.msra.mxu0 0.0
    %131 = vmatpush.msra.mxu0 0.0
    %132 = vmatpush.msra.mxu0 0.0
    %133 = vmatpush.msra.mxu0 0.0
    %134 = vmatpush.msra.mxu0 %v81
    %135 = vmatpush.msra.mxu0 %v80
    %136 = vmatpush.msra.mxu0 %v79
    %137 = vmatpush.msra.mxu0 %v78
    %138 = vmatmul.f32.gmra.mxu0 %v120
    %v139 = vpop.f32.mrf.mxu0
    %v140 = vadd.f32 %v116, %v139
    %141 = vdwg.mxu0
    %v142 = vld [vmem:[%s5] sm:$0x1]
    %v144 = vperm.slane %v142, 0
    %v146 = vadd.f32 %v140, %v144
    %v147 = vtanh.pop %v146
    %v148 = vsub.f32 %v147, %v75
    %150 = vset.pattern.permute.xlu0 0
    %151 = vperm.xlu0 %150, %v76
    %v152 = vpop.permute.xlu0 %151
    %v154 = vmul.f32 %v152, %v148
    %v155 = vadd.f32 %v75, %v154
    %156 = vst [vmem:[#allocation2] sm:$0xff] %v155
    // Predicated region
    $region42: #{tpu_custom_call.1} parent=1 // pred_check
      %p157 = pneg %p69
    $region43: #{tpu_custom_call.1} parent=1 // pred_check_branch
      %159 = sbr.rel (%p157) target = $region45
    $region44: #{tpu_custom_call.1} parent=1 // pred_region
      %160 = vst [vmem:[#allocation9] sm:$0xff] %v155
    $region45: #{tpu_custom_call.1} parent=1 // pred_fallthru
      _
    // Predicated region
    $region46: #{tpu_custom_call.1} parent=1 // pred_check
      _
    $region47: #{tpu_custom_call.1} parent=1 // pred_check_branch
      %162 = sbr.rel (0) target = $region49
    $region48: #{tpu_custom_call.1} parent=1 // pred_region
      %164 = vsyncadd [#allocation5], 0
      %s166 = sshll.u32 [#allocation9], 4
      %s167 = int_to_ptr.vmem [resolvable:$true] %s166
      %s168 = sshll.u32 %s6, 4
      %s169 = int_to_ptr.hbm [resolvable:$true] %s168
      %171 = dma.vmem_to_hbm [thread:$0]  %s167, 128, %s169, [#allocation5]
    $region49: #{tpu_custom_call.1} parent=1 // pred_fallthru
      _
    // Predicated region
    $region50: #{tpu_custom_call.1} parent=1 // pred_check
      _
    $region51: #{tpu_custom_call.1} parent=1 // pred_check_branch
      %173 = sbr.rel (0) target = $region53
    $region52: #{tpu_custom_call.1} parent=1 // pred_region
      %175 = dma.done [#allocation5], 128
    $region53: #{tpu_custom_call.1} parent=1 // pred_fallthru
      _
    %176 = vsyncpa [#allocation4], 1
    %177 = vsyncpa [#allocation7], 1
    %178 = vsyncpa [#allocation5], 1

</llo_original>
